<compile_context>
chip_gen: v7x
topology: tpu7x:2x2x1
jax: 0.10.0
libtpu: 0.0.40
codegen_flags: <defaults>
</compile_context>

<pallas_src>
import jax
import jax.numpy as jnp
from jax.experimental import pallas as pl
from jax.experimental.pallas import tpu as pltpu


# ---------------------------------------------------------------------------
# Kernel
# ---------------------------------------------------------------------------

def _docloss_partial_kernel(x_ref, o_ref):
    """Per-block partial sums of squared row-centered values.

    x_ref: (TB, C) input block (TB a multiple of 8, C = full class dim).
    o_ref: (1, 8, C) per-block partial (summed + scaled in the wrapper).
    """
    x = x_ref[...].astype(jnp.float32)               # (TB, C), cast in-kernel
    tb, c = x.shape
    mu = jnp.mean(x, axis=1, keepdims=True)          # per-row mean over classes
    d = x - mu
    dsq = d * d                                      # (TB, C)
    # Fold rows into sublane groups of 8: pure VPU adds on f32 native tiles.
    # The cross-lane/cross-sublane reduce over the tiny (nb, 8, C) partials is
    # deferred to the wrapper and paid exactly once.
    folded = jnp.sum(dsq.reshape(tb // 8, 8, c), axis=0)   # (8, C)
    o_ref[...] = folded.reshape(1, 8, c)


# ---------------------------------------------------------------------------
# Wrapper
# ---------------------------------------------------------------------------

def _row_multiple(dtype):
    """Native sublane-packing row multiple for the input dtype."""
    itemsize = jnp.dtype(dtype).itemsize
    if itemsize >= 4:
        return 8
    if itemsize == 2:
        return 16
    return 32


def _pick_block_rows(B, C, dtype, requested=None):
    """Row-tile size: ~6 MiB of input per step, dtype-aligned, >=2 grid steps
    whenever the (padded) batch allows it."""
    mult = _row_multiple(dtype)
    itemsize = jnp.dtype(dtype).itemsize

    if requested is not None:
        tb = max(mult, (int(requested) // mult) * mult)
    else:
        target_bytes = 6 * 1024 * 1024                # x2 double-buffered
        tb = max(mult, (target_bytes // max(1, C * itemsize)) // mult * mult)

    # Rows if a single tile covered the whole (dtype-aligned) batch.
    b_pad_one = pl.cdiv(B, mult) * mult
    if tb >= b_pad_one:
        if b_pad_one > mult:
            # Split into two roughly equal multiple-of-`mult` tiles so the
            # "parallel" grid axis can shard across v7x's two TensorCores.
            tb = pl.cdiv(pl.cdiv(B, 2), mult) * mult
        else:
            tb = b_pad_one                            # tiny input: one tile
    return tb


def doc_loss(outputs, batchsize, classes_num, block_rows=None):
    """Pallas implementation of DocLoss.forward.  Returns a scalar float32."""
    B, C = outputs.shape
    assert B == batchsize and C == classes_num
    if batchsize <= 1:
        # Same (B-1)^2 hazard as the PyTorch original; fail loudly instead.
        raise ValueError("DocLoss requires batchsize > 1 ((B-1)^2 denominator).")

    # 1/(B*C) * B^2 / (B-1)^2  -- always uses the ORIGINAL batch size.
    scale = (float(batchsize) ** 2
             / (float(batchsize) * float(classes_num)
                * float(batchsize - 1) ** 2))

    itemsize = jnp.dtype(outputs.dtype).itemsize
    tb = _pick_block_rows(B, C, outputs.dtype, block_rows)
    nb = pl.cdiv(B, tb)
    B_pad = nb * tb

    x = outputs
    if B_pad != B:
        # Zero rows have mean 0 => contribute exactly 0 to the sum.
        x = jnp.pad(outputs, ((0, B_pad - B), (0, 0)))

    tile_bytes = tb * C * itemsize
    vmem_limit = min(100 * 1024 * 1024,
                     max(32 * 1024 * 1024, 3 * tile_bytes))

    partials = pl.pallas_call(
        _docloss_partial_kernel,
        out_shape=jax.ShapeDtypeStruct((nb, 8, C), jnp.float32),
        grid_spec=pltpu.PrefetchScalarGridSpec(
            num_scalar_prefetch=0,
            grid=(nb,),
            in_specs=[pl.BlockSpec((tb, C), lambda i: (i, 0))],
            out_specs=pl.BlockSpec((1, 8, C), lambda i: (i, 0, 0)),
        ),
        compiler_params=pltpu.CompilerParams(
            dimension_semantics=("parallel",),
            vmem_limit_bytes=vmem_limit,
        ),
    )(x)

    # Tiny final reduce + constant scale, done once outside the kernel.
    return jnp.sum(partials) * jnp.float32(scale)


def doc_loss_ref(outputs, batchsize, classes_num):
    x = outputs.astype(jnp.float32)
    mu = jnp.mean(x, axis=1, keepdims=True)
    return (1.0 / (batchsize * classes_num)
            * batchsize ** 2
            * jnp.sum((x - mu) ** 2 / (batchsize - 1) ** 2))


if __name__ == "__main__":
    # 1) Explicit block_rows: 64 x 256 f32, 16-row blocks -> grid=(4,), no pad.
    batchsize, classes_num = 64, 256
    key = jax.random.PRNGKey(0)
    outputs = jax.random.normal(key, (batchsize, classes_num), dtype=jnp.float32)

    loss = jax.block_until_ready(
        doc_loss(outputs, batchsize, classes_num, block_rows=16))
    ref = jax.block_until_ready(doc_loss_ref(outputs, batchsize, classes_num))
    assert jnp.allclose(loss, ref, rtol=1e-5, atol=1e-6), (loss, ref)

    # 2) Auto tile sizing with bf16 input and a batch that is NOT a multiple of
    #    the 16-row bf16 tile: exercises zero-padding (exact) + in-kernel cast.
    b2, c2 = 12, 128
    out2 = jax.random.normal(jax.random.PRNGKey(1), (b2, c2), dtype=jnp.bfloat16)
    loss2 = jax.block_until_ready(doc_loss(out2, b2, c2))
    ref2 = jax.block_until_ready(doc_loss_ref(out2, b2, c2))
    assert jnp.allclose(loss2, ref2, rtol=1e-4, atol=1e-5), (loss2, ref2)

    # 3) Auto tile sizing, f32, awkward batch (40): split into two tiles of 24
    #    rows with an 8-row zero pad -> exercises pad + 2-step parallel grid.
    b3, c3 = 40, 128
    out3 = jax.random.normal(jax.random.PRNGKey(2), (b3, c3), dtype=jnp.float32)
    loss3 = jax.block_until_ready(doc_loss(out3, b3, c3))
    ref3 = jax.block_until_ready(doc_loss_ref(out3, b3, c3))
    assert jnp.allclose(loss3, ref3, rtol=1e-5, atol=1e-6), (loss3, ref3)

    print("KERNEL_OK")
</pallas_src>

<mosaic_0001>
module attributes {stable_mosaic.version = 11 : i64} {
  func.func @_docloss_partial_kernel(%arg0: i32, %arg1: memref<16x256xf32, #tpu.memory_space<vmem>>, %arg2: memref<1x8x256xf32, #tpu.memory_space<vmem>>) attributes {dimension_semantics = [#tpu.dimension_semantics<parallel>], iteration_bounds = array<i64: 4>, scalar_prefetch = 0 : i64, scratch_operands = 0 : i64, tpu.core_type = #tpu.core_type<tc>, window_params = [{transform_indices = @transform_0, window_bounds = array<i64: 16, 256>}, {transform_indices = @transform_1, window_bounds = array<i64: 1, 8, 256>}]} {
    %c0 = arith.constant 0 : index
    %c0_0 = arith.constant 0 : index
    %0 = vector.load %arg1[%c0, %c0_0] : memref<16x256xf32, #tpu.memory_space<vmem>>, vector<16x256xf32>
    %cst = arith.constant dense<0.000000e+00> : vector<16xf32>
    %1 = vector.multi_reduction <add>, %0, %cst [1] : vector<16x256xf32> to vector<16xf32>
    %2 = vector.shape_cast %1 : vector<16xf32> to vector<16x1xf32>
    %cst_1 = arith.constant 2.560000e+02 : f32
    %3 = vector.broadcast %cst_1 : f32 to vector<16x1xf32>
    %4 = arith.divf %2, %3 : vector<16x1xf32>
    %5 = vector.broadcast %4 : vector<16x1xf32> to vector<16x256xf32>
    %6 = arith.subf %0, %5 : vector<16x256xf32>
    %7 = arith.mulf %6, %6 : vector<16x256xf32>
    %8 = vector.shape_cast %7 : vector<16x256xf32> to vector<2x8x256xf32>
    %cst_2 = arith.constant dense<0.000000e+00> : vector<8x256xf32>
    %9 = vector.multi_reduction <add>, %8, %cst_2 [0] : vector<2x8x256xf32> to vector<8x256xf32>
    %10 = vector.shape_cast %9 : vector<8x256xf32> to vector<1x8x256xf32>
    %c0_3 = arith.constant 0 : index
    %c0_4 = arith.constant 0 : index
    %c0_5 = arith.constant 0 : index
    %11 = vector.load %arg2[%c0_3, %c0_4, %c0_5] : memref<1x8x256xf32, #tpu.memory_space<vmem>>, vector<1x8x256xf32>
    tpu.vector_store %arg2[%c0_3, %c0_4, %c0_5], %10 {strides = array<i32>} : memref<1x8x256xf32, #tpu.memory_space<vmem>>, vector<1x8x256xf32>,
    return
  }
  func.func @transform_0(%arg0: i32) -> (i32, i32) {
    %c0_i32 = arith.constant 0 : i32
    %c0_i32_0 = arith.constant 0 : i32
    return %arg0, %c0_i32 : i32, i32
  }
  func.func @transform_1(%arg0: i32) -> (i32, i32, i32) {
    %c0_i32 = arith.constant 0 : i32
    %c0_i32_0 = arith.constant 0 : i32
    %c0_i32_1 = arith.constant 0 : i32
    return %arg0, %c0_i32, %c0_i32_0 : i32, i32, i32
  }
}

</mosaic_0001>

<llo_original>
// kernel: tpu_custom_call.1
$region0: #{tpu_custom_call.1}
  #allocation0 [shape = 'u32[]', space=smem, size = 0x4, offset = 0x4, fixed_abs, tag = 'smem constant byte address 0x4 - core index']
  #allocation1 [shape = 'u32[144,128]{1,0:T(1,128)}', space=vmem, size = 0x12000, scoped, tag = 'internal scratch']
  %s0 = inlined_call_operand.hbm [shape: f32[64,256], index: 0, kind: input, shape index: {}]
  %s1 = inlined_call_operand.hbm [shape: f32[4,8,256], index: 1, kind: output, shape index: {}]
  %s2 = sld [smem:[#allocation0]]
  $region41: #{tpu_custom_call.1} parent=0
    _
  %s4 = ssub.s32 1, %s2
  %s5 = scalar_select 0, %s4, %s2
  $region1: #{tpu_custom_call.1} parent=0
    #allocation2 [shape = 'u8[32768]{0}', space=vmem, size = 0x8000, scoped, tag = 'input window, operand 0']
    #allocation3 [shape = 's32[2]{0}', space=sflag, size = 0x8, scoped, tag = 'scoped memory for tpu_custom_call.1']
    #allocation4 [shape = 's32[2]{0}', space=sflag, size = 0x8, scoped, tag = 'scoped memory for tpu_custom_call.1']
    #allocation5 [shape = 'u8[16384]{0}', space=vmem, size = 0x4000, scoped, tag = 'output window, operand 0']
    %6 = vsyncpa [#allocation3], 0
    %s7 = scalar_lea.sflag [#allocation3], 1
    %8 = vsyncpa %s7, 0
    %9 = vsyncpa [#allocation4], 0
    %s10 = scalar_lea.sflag [#allocation4], 1
    %11 = vsyncpa %s10, 0
    loop: start=0, step=1, limit=6
    $region2: #{tpu_custom_call.1} parent=1 // loop_pre_header
      _
    $region3: #{tpu_custom_call.1} parent=1 // loop_header
      %s13 = sphi 0, %s17
      %p14 = scmp.ge.s32.totalorder %s13, 6
      %s23 = sphi 0, %s25
      %s26 = sphi 0, %s23
      %s27 = sphi 0, %s26
      %s43 = sphi 0, %s27
      %s49 = sphi 0, %s51
      %s52 = sphi 0, %s49
      %s53 = sphi 0, %s52
      %s69 = sphi 0, %s53
    $region4: #{tpu_custom_call.1} parent=1 // loop_header_branch
      %16 = sbr.rel (%p14) target = $region8
    $region5: #{tpu_custom_call.1} parent=1 // loop_body
      %s18 = ssub.s32 %s13, 1
      %s19 = ssub.s32 %s13, 2
      %s20 = sadd.s32 %s13, 1
      %s21 = ssub.s32 %s13, %s20
      %p22 = scmp.eq.s32.totalorder %s21, 0
      %s24 = sadd.s32 %s23, 1
      %s25 = scalar_select %p22, %s23, %s24
      %p28 = pneg %p22
      %p29 = scmp.eq.s32.totalorder %s13, 3
      %p30 = por %p28, %p29
      %p31 = scmp.ne.s32.totalorder %s23, %s26
      %p32 = scmp.eq.s32.totalorder %s13, 0
      %p33 = por %p31, %p32
      %p34 = scmp.ne.s32.totalorder %s23, %s26
      %p35 = scmp.eq.s32.totalorder %s18, 3
      %p36 = por %p34, %p35
      %p37 = scmp.ne.s32.totalorder %s26, %s27
      %p38 = scmp.eq.s32.totalorder %s18, 0
      %p39 = por %p37, %p38
      %p40 = scmp.ne.s32.totalorder %s26, %s27
      %p41 = scmp.eq.s32.totalorder %s19, 3
      %p42 = por %p40, %p41
      %p44 = scmp.ne.s32.totalorder %s27, %s43
      %p45 = scmp.eq.s32.totalorder %s19, 0
      %p46 = por %p44, %p45
      %s47 = ssub.s32 %s13, %s20
      %p48 = scmp.eq.s32.totalorder %s47, 0
      %s50 = sadd.s32 %s49, 1
      %s51 = scalar_select %p48, %s49, %s50
      %p54 = pneg %p48
      %p55 = scmp.eq.s32.totalorder %s13, 3
      %p56 = por %p54, %p55
      %p57 = scmp.ne.s32.totalorder %s49, %s52
      %p58 = scmp.eq.s32.totalorder %s13, 0
      %p59 = por %p57, %p58
      %p60 = scmp.ne.s32.totalorder %s49, %s52
      %p61 = scmp.eq.s32.totalorder %s18, 3
      %p62 = por %p60, %p61
      %p63 = scmp.ne.s32.totalorder %s52, %s53
      %p64 = scmp.eq.s32.totalorder %s18, 0
      %p65 = por %p63, %p64
      %p66 = scmp.ne.s32.totalorder %s52, %s53
      %p67 = scmp.eq.s32.totalorder %s19, 3
      %p68 = por %p66, %p67
      %p70 = scmp.ne.s32.totalorder %s53, %s69
      %p71 = scmp.eq.s32.totalorder %s19, 0
      %p72 = por %p70, %p71
      %p73 = scmp.le.s32.totalorder 1, %s13
      %p74 = scmp.lt.s32.totalorder %s13, 5
      %p75 = pnand %p73, %p74
      %p76 = pneg %p75
      // Predicated region
      $region9: #{tpu_custom_call.1} parent=5 // pred_check
        _
      $region10: #{tpu_custom_call.1} parent=5 // pred_check_branch
        %78 = sbr.rel (%p75) target = $region12
      $region11: #{tpu_custom_call.1} parent=5 // pred_region
        %s79 = ssub.s32 %s13, 1
      $region12: #{tpu_custom_call.1} parent=5 // pred_fallthru
        _
      %p80 = scmp.lt.s32.totalorder %s13, 4
      // Predicated region
      $region13: #{tpu_custom_call.1} parent=5 // pred_check
        %p81 = pneg %p80
      $region14: #{tpu_custom_call.1} parent=5 // pred_check_branch
        %83 = sbr.rel (%p81) target = $region16
      $region15: #{tpu_custom_call.1} parent=5 // pred_region
        // Predicated region
        $region17: #{tpu_custom_call.1} parent=15 // pred_check
          %p84 = pneg %p33
        $region18: #{tpu_custom_call.1} parent=15 // pred_check_branch
          %86 = sbr.rel (%p84) target = $region20
        $region19: #{tpu_custom_call.1} parent=15 // pred_region
          %s87 = sand.u32 %s23, 1
          %s88 = scalar_lea.sflag [#allocation3], %s87
          %s89 = sand.u32 %s23, 1
          %s90 = smul.addr %s89, 32
          %s91 = scalar_lea.vmem [#allocation2], %s90
          %s92 = smul.u32 2, %s13
          %s94 = ssub.s32 512, 512
          %95 = vsyncadd %s88, %s94
          %s96 = smul.addr %s92, 2
          %s97 = smul.addr %s96, 128
          %s98 = scalar_lea.hbm %s0, %s97
          %s99 = sshll.u32 %s91, 4
          %s100 = int_to_ptr.vmem [resolvable:$true] %s99
          %105 = dma.hbm_to_vmem [thread:$0]  %s98, 512, %s100, %s88, 256, 256, 16
        $region20: #{tpu_custom_call.1} parent=15 // pred_fallthru
          _
      $region16: #{tpu_custom_call.1} parent=5 // pred_fallthru
        _
      %p106 = scmp.le.s32.totalorder 1, %s13
      %p107 = scmp.lt.s32.totalorder %s13, 5
      %p108 = pnand %p106, %p107
      %p109 = pneg %p108
      // Predicated region
      $region21: #{tpu_custom_call.1} parent=5 // pred_check
        _
      $region22: #{tpu_custom_call.1} parent=5 // pred_check_branch
        %111 = sbr.rel (%p108) target = $region24
      $region23: #{tpu_custom_call.1} parent=5 // pred_region
        %s112 = ssub.s32 %s13, 1
        %s113 = sand.u32 %s26, 1
        %s114 = scalar_lea.sflag [#allocation3], %s113
        %s115 = sand.u32 %s26, 1
        %s116 = smul.addr %s115, 32
        %s117 = scalar_lea.vmem [#allocation2], %s116
        // Predicated region
        $region25: #{tpu_custom_call.1} parent=23 // pred_check
          %p118 = pneg %p39
        $region26: #{tpu_custom_call.1} parent=23 // pred_check_branch
          %120 = sbr.rel (%p118) target = $region28
        $region27: #{tpu_custom_call.1} parent=23 // pred_region
          %121 = dma.done %s114, 512
        $region28: #{tpu_custom_call.1} parent=23 // pred_fallthru
          _
        %s122 = sand.u32 %s26, 1
        %s123 = scalar_lea.sflag [#allocation3], %s122
        %s124 = sand.u32 %s26, 1
        %s125 = smul.addr %s124, 32
        %s126 = scalar_lea.vmem [#allocation2], %s125
        %p127 = pneg %p39
        %p128 = pneg %p36
        %p129 = pneg %p65
        %p130 = pneg %p62
        %s131 = sand.u32 %s52, 1
        %s132 = scalar_lea.sflag [#allocation4], %s131
        %s133 = sand.u32 %s52, 1
        %s134 = smul.addr %s133, 16
        %s135 = scalar_lea.vmem [#allocation5], %s134
        %s136 = smul.u32 2, %s18
        %v137 = vld [vmem:[%s117] sm:$0xff]
        %v138 = vld [vmem:[%s117 + $0x8] sm:$0xff]
        %v139 = vld [vmem:[%s117 + $0x10] sm:$0xff]
        %v140 = vld [vmem:[%s117 + $0x18] sm:$0xff]
        %v141 = vadd.f32 %v137, %v138
        %142 = vadd.xlane.f32.xlu0 %v141
        %v143 = vpop.xlane.xlu0 %142
        %v144 = vadd.f32 %v139, %v140
        %145 = vadd.xlane.f32.xlu0 %v144
        %v146 = vpop.xlane.xlu0 %145
        %v147 = vrcp.pop 256.0
        %v148 = vmul.f32 %v143, %v147
        %v149 = vmul.f32 %v146, %v147
        %v150 = vsub.f32 %v137, %v148
        %v151 = vsub.f32 %v138, %v148
        %v152 = vsub.f32 %v139, %v149
        %v153 = vsub.f32 %v140, %v149
        %v154 = vmul.f32 %v150, %v150
        %v155 = vmul.f32 %v151, %v151
        %v156 = vmul.f32 %v152, %v152
        %v157 = vmul.f32 %v153, %v153
        %v158 = vadd.f32 %v154, %v156
        %v159 = vadd.f32 %v155, %v157
        %160 = vst [vmem:[%s135] sm:$0xff] %v158
        %161 = vst [vmem:[%s135 + $0x8] sm:$0xff] %v159
        %s162 = sand.u32 %s52, 1
        %s163 = scalar_lea.sflag [#allocation4], %s162
        %s164 = sand.u32 %s52, 1
        %s165 = smul.addr %s164, 16
        %s166 = scalar_lea.vmem [#allocation5], %s165
        // Predicated region
        $region29: #{tpu_custom_call.1} parent=23 // pred_check
          %p167 = pneg %p62
        $region30: #{tpu_custom_call.1} parent=23 // pred_check_branch
          %169 = sbr.rel (%p167) target = $region32
        $region31: #{tpu_custom_call.1} parent=23 // pred_region
          %s171 = ssub.s32 256, 256
          %172 = vsyncadd %s163, %s171
          %s173 = smul.addr %s18, 2
          %s174 = smul.addr %s173, 128
          %s175 = scalar_lea.hbm %s1, %s174
          %s177 = sshll.u32 %s166, 4
          %s178 = int_to_ptr.vmem [resolvable:$true] %s177
          %180 = dma.vmem_to_hbm [thread:$0]  %s178, 256, %s175, %s163
        $region32: #{tpu_custom_call.1} parent=23 // pred_fallthru
          _
      $region24: #{tpu_custom_call.1} parent=5 // pred_fallthru
        _
      %p181 = scmp.le.s32.totalorder 2, %s13
      // Predicated region
      $region33: #{tpu_custom_call.1} parent=5 // pred_check
        %p182 = pneg %p181
      $region34: #{tpu_custom_call.1} parent=5 // pred_check_branch
        %184 = sbr.rel (%p182) target = $region36
      $region35: #{tpu_custom_call.1} parent=5 // pred_region
        %s185 = ssub.s32 %s13, 2
        // Predicated region
        $region37: #{tpu_custom_call.1} parent=35 // pred_check
          %p186 = pneg %p68
        $region38: #{tpu_custom_call.1} parent=35 // pred_check_branch
          %188 = sbr.rel (%p186) target = $region40
        $region39: #{tpu_custom_call.1} parent=35 // pred_region
          %s189 = sand.u32 %s53, 1
          %s190 = scalar_lea.sflag [#allocation4], %s189
          %s191 = sand.u32 %s53, 1
          %s192 = smul.addr %s191, 16
          %s193 = scalar_lea.vmem [#allocation5], %s192
          %194 = dma.done %s190, 256
        $region40: #{tpu_custom_call.1} parent=35 // pred_fallthru
          _
      $region36: #{tpu_custom_call.1} parent=5 // pred_fallthru
        _
    $region6: #{tpu_custom_call.1} parent=1 // loop_footer
      %s17 = sadd.s32 1, %s13
    $region7: #{tpu_custom_call.1} parent=1 // loop_footer_branch
      %12 = sbr.rel target = $region3
    $region8: #{tpu_custom_call.1} parent=1 // loop_exit
      _
    %195 = vsyncpa [#allocation3], 1
    %s196 = scalar_lea.sflag [#allocation3], 1
    %197 = vsyncpa %s196, 1
    %198 = vsyncpa [#allocation4], 1
    %s199 = scalar_lea.sflag [#allocation4], 1
    %200 = vsyncpa %s199, 1

</llo_original>
